<compile_context>
chip_gen: v6e
topology: v6e:2x2x1
jax: 0.10.0
libtpu: 0.0.40
codegen_flags: <defaults>
</compile_context>

<pallas_src>
import functools

import jax
import jax.numpy as jnp
from jax.experimental import pallas as pl
from jax.experimental.pallas import tpu as pltpu


def _simam_kernel(x_ref, o_ref, *, hw_true, e_lambda):
    """One (row_tile, HW_pad) block per grid step.

    x_ref / o_ref : VMEM (Rt, HWp) blocks; rows are flattened (b, c) pairs.
    """
    hw_pad = x_ref.shape[-1]
    inv_hw = 1.0 / hw_true
    # TODO(synk): original PyTorch divides by n = H*W - 1 (== 0 when H*W == 1);
    # we clamp to 1 to stay finite for that degenerate shape.
    inv_n = 1.0 / max(hw_true - 1, 1)

    # Lane-validity mask for the padded spatial tail (static no-op when unpadded).
    if hw_pad != hw_true:
        lane = jax.lax.broadcasted_iota(jnp.int32, (1, hw_pad), 1)
        valid = lane < hw_true
    else:
        valid = None

    xf = x_ref[...].astype(jnp.float32)                         # (Rt, HWp)

    # --- Reduction 1: per-row spatial mean over the true H*W extent. ---------
    xr = xf if valid is None else jnp.where(valid, xf, 0.0)
    mu = jnp.sum(xr, axis=-1, keepdims=True) * inv_hw           # (Rt, 1)

    # --- Reduction 2: per-row sum of squared deviations. ---------------------
    dev = xf - mu
    d = dev * dev
    dr = d if valid is None else jnp.where(valid, d, 0.0)
    s = jnp.sum(dr, axis=-1, keepdims=True)                     # (Rt, 1)

    # Energy denominator: tiny (Rt, 1) vector, exact reciprocal.
    inv_denom = 1.0 / (4.0 * (s * inv_n + e_lambda))            # (Rt, 1)

    # --- Fused gate + store pass. --------------------------------------------
    # Re-read the input block (already resident in VMEM) and recompute the
    # deviation so no full-tile f32 intermediate needs to live across the
    # reductions above.
    xg = x_ref[...].astype(jnp.float32)
    devg = xg - mu
    y = devg * devg * inv_denom + 0.5
    o_ref[...] = (xg * jax.nn.sigmoid(y)).astype(o_ref.dtype)


def _round_up(v, m):
    return -(-v // m) * m


def _pick_row_tile(n_rows, hw_pad, itemsize, sublane,
                   budget_bytes=1 << 20, min_steps=8):
    """Row tile: sublane-aligned, <= VMEM block budget, and (when possible)
    small enough that the grid has >= min_steps steps."""
    row_bytes = hw_pad * itemsize
    cap_budget = max(sublane, (budget_bytes // max(row_bytes, 1)) // sublane * sublane)
    cap_steps = max(sublane, (_round_up(n_rows, min_steps) // min_steps)
                    // sublane * sublane)
    return max(sublane, min(cap_budget, cap_steps))


def simam(x, e_lambda=1e-4):
    """x: (B, C, H, W) -> SimAM-gated tensor of the same shape/dtype."""
    B, C, H, W = x.shape
    HW = H * W
    BC = B * C
    itemsize = jnp.dtype(x.dtype).itemsize
    sublane = {1: 32, 2: 16, 4: 8}.get(itemsize, 8)

    # Lane-dense spatial axis.
    HW_pad = max(128, _round_up(HW, 128))

    row_tile = _pick_row_tile(BC, HW_pad, itemsize, sublane)
    BC_pad = _round_up(BC, row_tile)
    n_tiles = BC_pad // row_tile

    x2 = x.reshape(BC, HW)
    pad_rows, pad_cols = BC_pad - BC, HW_pad - HW
    if pad_rows or pad_cols:
        x2 = jnp.pad(x2, ((0, pad_rows), (0, pad_cols)))

    kernel = functools.partial(_simam_kernel, hw_true=HW,
                               e_lambda=float(e_lambda))

    block = (row_tile, HW_pad)
    block_bytes = row_tile * HW_pad * itemsize
    in_spec_kwargs = {}
    if block_bytes <= (256 << 10) and n_tiles >= 4:
        # Deeper buffering to hide per-step DMA latency when blocks are small.
        in_spec_kwargs["pipeline_mode"] = pl.Buffered(3)
    in_spec = pl.BlockSpec(block, lambda i: (i, 0), **in_spec_kwargs)
    out_spec = pl.BlockSpec(block, lambda i: (i, 0))

    cost = pl.CostEstimate(
        flops=10 * BC * HW,
        transcendentals=BC * HW,
        bytes_accessed=2 * BC * HW * itemsize,
    )

    out = pl.pallas_call(
        kernel,
        out_shape=jax.ShapeDtypeStruct((BC_pad, HW_pad), x.dtype),
        grid=(n_tiles,),
        in_specs=[in_spec],
        out_specs=out_spec,
        cost_estimate=cost,
        compiler_params=pltpu.CompilerParams(
            dimension_semantics=("parallel",),
            vmem_limit_bytes=32 * 1024 * 1024,   # safe on v5e/v6e/v7x
        ),
    )(x2)

    return out[:BC, :HW].reshape(B, C, H, W)


def simam_reference(x, e_lambda=1e-4):
    """Pure-JAX reference mirroring the PyTorch SimAM forward."""
    h, w = x.shape[2], x.shape[3]
    n = h * w - 1
    mu = jnp.mean(x, axis=(2, 3), keepdims=True)
    d = (x - mu) ** 2
    y = d / (4.0 * (jnp.sum(d, axis=(2, 3), keepdims=True) / n + e_lambda)) + 0.5
    return x * jax.nn.sigmoid(y)


if __name__ == "__main__":
    key = jax.random.PRNGKey(0)

    B, C, H, W = 2, 4, 16, 16
    e_lambda = 1e-4

    x = jax.random.normal(key, (B, C, H, W), dtype=jnp.float32)

    out = simam(x, e_lambda=e_lambda)
    out = jax.block_until_ready(out)

    ref = simam_reference(x, e_lambda=e_lambda)
    assert out.shape == x.shape and out.dtype == x.dtype
    assert jnp.allclose(out, ref, atol=1e-5, rtol=1e-5), "mismatch vs reference"

    # Also exercise a non-128-multiple spatial size (masked-reduction path).
    x2 = jax.random.normal(key, (1, 8, 7, 7), dtype=jnp.float32)
    out2 = jax.block_until_ready(simam(x2, e_lambda=e_lambda))
    ref2 = simam_reference(x2, e_lambda=e_lambda)
    assert jnp.allclose(out2, ref2, atol=1e-5, rtol=1e-5), "mismatch (padded path)"

    print("KERNEL_OK")
</pallas_src>

<mosaic_0001>
module attributes {stable_mosaic.version = 11 : i64} {
  func.func @_simam_kernel(%arg0: i32, %arg1: memref<8x256xf32, #tpu.memory_space<vmem>>, %arg2: memref<8x256xf32, #tpu.memory_space<vmem>>) attributes {dimension_semantics = [#tpu.dimension_semantics<parallel>], iteration_bounds = array<i64: 1>, scalar_prefetch = 0 : i64, scratch_operands = 0 : i64, tpu.core_type = #tpu.core_type<tc>, window_params = [{transform_indices = @transform_0, window_bounds = array<i64: 8, 256>}, {transform_indices = @transform_1, window_bounds = array<i64: 8, 256>}]} {
    %c0 = arith.constant 0 : index
    %c0_0 = arith.constant 0 : index
    %0 = vector.load %arg1[%c0, %c0_0] : memref<8x256xf32, #tpu.memory_space<vmem>>, vector<8x256xf32>
    %cst = arith.constant dense<0.000000e+00> : vector<8xf32>
    %1 = vector.multi_reduction <add>, %0, %cst [1] : vector<8x256xf32> to vector<8xf32>
    %2 = vector.shape_cast %1 : vector<8xf32> to vector<8x1xf32>
    %cst_1 = arith.constant 3.906250e-03 : f32
    %3 = vector.broadcast %cst_1 : f32 to vector<8x1xf32>
    %4 = arith.mulf %2, %3 : vector<8x1xf32>
    %5 = vector.broadcast %4 : vector<8x1xf32> to vector<8x256xf32>
    %6 = arith.subf %0, %5 : vector<8x256xf32>
    %7 = arith.mulf %6, %6 : vector<8x256xf32>
    %cst_2 = arith.constant dense<0.000000e+00> : vector<8xf32>
    %8 = vector.multi_reduction <add>, %7, %cst_2 [1] : vector<8x256xf32> to vector<8xf32>
    %9 = vector.shape_cast %8 : vector<8xf32> to vector<8x1xf32>
    %cst_3 = arith.constant 0.00392156886 : f32
    %10 = vector.broadcast %cst_3 : f32 to vector<8x1xf32>
    %11 = arith.mulf %9, %10 : vector<8x1xf32>
    %cst_4 = arith.constant 9.99999974E-5 : f32
    %12 = vector.broadcast %cst_4 : f32 to vector<8x1xf32>
    %13 = arith.addf %11, %12 : vector<8x1xf32>
    %cst_5 = arith.constant 4.000000e+00 : f32
    %14 = vector.broadcast %cst_5 : f32 to vector<8x1xf32>
    %15 = arith.mulf %14, %13 : vector<8x1xf32>
    %cst_6 = arith.constant 1.000000e+00 : f32
    %16 = vector.broadcast %cst_6 : f32 to vector<8x1xf32>
    %17 = arith.divf %16, %15 : vector<8x1xf32>
    %c0_7 = arith.constant 0 : index
    %c0_8 = arith.constant 0 : index
    %18 = vector.load %arg1[%c0_7, %c0_8] : memref<8x256xf32, #tpu.memory_space<vmem>>, vector<8x256xf32>
    %19 = vector.broadcast %4 : vector<8x1xf32> to vector<8x256xf32>
    %20 = arith.subf %18, %19 : vector<8x256xf32>
    %21 = arith.mulf %20, %20 : vector<8x256xf32>
    %22 = vector.broadcast %17 : vector<8x1xf32> to vector<8x256xf32>
    %23 = arith.mulf %21, %22 : vector<8x256xf32>
    %cst_9 = arith.constant 5.000000e-01 : f32
    %24 = vector.broadcast %cst_9 : f32 to vector<8x256xf32>
    %25 = arith.addf %23, %24 : vector<8x256xf32>
    %26 = arith.negf %25 : vector<8x256xf32>
    %27 = math.exp %26 : vector<8x256xf32>
    %cst_10 = arith.constant 1.000000e+00 : f32
    %28 = vector.broadcast %cst_10 : f32 to vector<8x256xf32>
    %29 = arith.addf %28, %27 : vector<8x256xf32>
    %30 = arith.divf %28, %29 : vector<8x256xf32>
    %31 = arith.mulf %18, %30 : vector<8x256xf32>
    %c0_11 = arith.constant 0 : index
    %c0_12 = arith.constant 0 : index
    %32 = vector.load %arg2[%c0_11, %c0_12] : memref<8x256xf32, #tpu.memory_space<vmem>>, vector<8x256xf32>
    tpu.vector_store %arg2[%c0_11, %c0_12], %31 {strides = array<i32>} : memref<8x256xf32, #tpu.memory_space<vmem>>, vector<8x256xf32>,
    return
  }
  func.func @transform_0(%arg0: i32) -> (i32, i32) {
    %c0_i32 = arith.constant 0 : i32
    %c0_i32_0 = arith.constant 0 : i32
    return %arg0, %c0_i32 : i32, i32
  }
  func.func @transform_1(%arg0: i32) -> (i32, i32) {
    %c0_i32 = arith.constant 0 : i32
    %c0_i32_0 = arith.constant 0 : i32
    return %arg0, %c0_i32 : i32, i32
  }
}

</mosaic_0001>

<llo_original>
// kernel: tpu_custom_call.1
$region0: #{tpu_custom_call.1}
  #allocation0 [shape = 'u32[]', space=smem, size = 0x4, offset = 0x4, fixed_abs, tag = 'smem constant byte address 0x4 - core index']
  #allocation1 [shape = 'u32[144,128]{1,0:T(1,128)}', space=vmem, size = 0x12000, scoped, tag = 'internal scratch']
  %s0 = inlined_call_operand.hbm [shape: f32[8,256], index: 0, kind: input, shape index: {}]
  %s1 = inlined_call_operand.hbm [shape: f32[8,256], index: 1, kind: output, shape index: {}]
  %s2 = sld [smem:[#allocation0]]
  $region18: #{tpu_custom_call.1} parent=0
    _
  %s4 = ssub.s32 1, %s2
  %s5 = scalar_select 0, %s4, %s2
  $region1: #{tpu_custom_call.1} parent=0
    #allocation2 [shape = 'u8[8192]{0}', space=vmem, size = 0x2000, scoped, tag = 'input window, operand 0, single buffered']
    #allocation3 [shape = 's32[1]{0}', space=sflag, size = 0x4, scoped, tag = 'scoped memory for tpu_custom_call.1']
    #allocation4 [shape = 's32[1]{0}', space=sflag, size = 0x4, scoped, tag = 'scoped memory for tpu_custom_call.1']
    #allocation5 [shape = 'u8[8192]{0}', space=vmem, size = 0x2000, scoped, tag = 'output window, operand 0, single buffered']
    %6 = vsyncpa [#allocation3], 0
    %7 = vsyncpa [#allocation4], 0
    // Predicated region
    $region2: #{tpu_custom_call.1} parent=1 // pred_check
      _
    $region3: #{tpu_custom_call.1} parent=1 // pred_check_branch
      %9 = sbr.rel (0) target = $region5
    $region4: #{tpu_custom_call.1} parent=1 // pred_region
      %s11 = ssub.s32 256, 256
      %12 = vsyncadd [#allocation3], %s11
      %s14 = sshll.u32 [#allocation2], 4
      %s15 = int_to_ptr.vmem [resolvable:$true] %s14
      %17 = dma.hbm_to_vmem [thread:$0]  %s0, 256, %s15, [#allocation3]
    $region5: #{tpu_custom_call.1} parent=1 // pred_fallthru
      _
    // Predicated region
    $region6: #{tpu_custom_call.1} parent=1 // pred_check
      _
    $region7: #{tpu_custom_call.1} parent=1 // pred_check_branch
      %19 = sbr.rel (0) target = $region9
    $region8: #{tpu_custom_call.1} parent=1 // pred_region
      %20 = dma.done [#allocation3], 256
    $region9: #{tpu_custom_call.1} parent=1 // pred_fallthru
      _
    %v21 = vld [vmem:[#allocation2] sm:$0xff]
    %v22 = vld [vmem:[#allocation2 + $0x8] sm:$0xff]
    %v23 = vadd.f32 %v21, %v22
    %24 = vadd.xlane.f32.xlu0 %v23
    %v25 = vpop.xlane.xlu0 %24
    %v26 = vmul.f32 %v25, 0.00390625
    %v27 = vsub.f32 %v21, %v26
    %v28 = vsub.f32 %v22, %v26
    %v29 = vmul.f32 %v27, %v27
    %v30 = vmul.f32 %v28, %v28
    %v31 = vadd.f32 %v29, %v30
    %32 = vadd.xlane.f32.xlu0 %v31
    %v33 = vpop.xlane.xlu0 %32
    %v34 = vmul.f32 %v33, 0.003921569
    %v35 = vadd.f32 %v34, 0.0001
    %v36 = vmul.f32 %v35, 4.0
    %v37 = vrcp.pop %v36
    %v38 = vmul.f32 1.0, %v37
    %v39 = vmul.f32 %v29, %v38
    %v40 = vmul.f32 %v30, %v38
    %v41 = vadd.f32 %v39, 0.5
    %v42 = vadd.f32 %v40, 0.5
    %v43 = vxor.u32 %v41, 2147483648
    %v44 = vxor.u32 %v42, 2147483648
    %v45 = vmul.f32 %v43, 1.442695
    %v46 = vpow.pop %v45
    %v47 = vmul.f32 %v44, 1.442695
    %v48 = vpow.pop %v47
    %v49 = vadd.f32 %v46, 1.0
    %v50 = vadd.f32 %v48, 1.0
    %v51 = vrcp.pop %v49
    %v52 = vmul.f32 1.0, %v51
    %v53 = vrcp.pop %v50
    %v54 = vmul.f32 1.0, %v53
    %v55 = vmul.f32 %v21, %v52
    %v56 = vmul.f32 %v22, %v54
    %57 = vst [vmem:[#allocation5] sm:$0xff] %v55
    %58 = vst [vmem:[#allocation5 + $0x8] sm:$0xff] %v56
    // Predicated region
    $region10: #{tpu_custom_call.1} parent=1 // pred_check
      _
    $region11: #{tpu_custom_call.1} parent=1 // pred_check_branch
      %60 = sbr.rel (0) target = $region13
    $region12: #{tpu_custom_call.1} parent=1 // pred_region
      %s62 = ssub.s32 256, 256
      %63 = vsyncadd [#allocation4], %s62
      %s65 = sshll.u32 [#allocation5], 4
      %s66 = int_to_ptr.vmem [resolvable:$true] %s65
      %68 = dma.vmem_to_hbm [thread:$0]  %s66, 256, %s1, [#allocation4]
    $region13: #{tpu_custom_call.1} parent=1 // pred_fallthru
      _
    // Predicated region
    $region14: #{tpu_custom_call.1} parent=1 // pred_check
      _
    $region15: #{tpu_custom_call.1} parent=1 // pred_check_branch
      %70 = sbr.rel (0) target = $region17
    $region16: #{tpu_custom_call.1} parent=1 // pred_region
      %71 = dma.done [#allocation4], 256
    $region17: #{tpu_custom_call.1} parent=1 // pred_fallthru
      _
    %72 = vsyncpa [#allocation3], 1
    %73 = vsyncpa [#allocation4], 1

</llo_original>
